<compile_context>
chip_gen: v7x
topology: tpu7x:2x2x1
jax: 0.10.0
libtpu: 0.0.40
codegen_flags: <defaults>
</compile_context>

<pallas_src>
import functools

import numpy as np
import jax
import jax.numpy as jnp
from jax.experimental import pallas as pl
from jax.experimental.pallas import tpu as pltpu

_MIB = 1024 * 1024


# --------------------------------------------------------------------------- #
# Kernel
# --------------------------------------------------------------------------- #
def _extract_and_pool_kernel(x_ref, w1_ref, b1_ref, w2_ref, b2_ref,
                             o_ref, acc_ref, *, set_size, block_b, tile_s, sub):
    """One (batch-block, set-tile) grid step.

    Hot loop:  h = ReLU(x @ W1 + b1) on the MXU/VPU, then VPU partial-sum of set
               rows into a (block_b, sub, H1) f32 accumulator (no XLU reduce, no
               MXU pooling matmul).
    Finalize:  collapse sublanes once, divide by |S|, apply W2/b2 once
               (mean-pool linearity), store the (block_b, 1, H) output tile.
    """
    s_idx = pl.program_id(1)

    @pl.when(s_idx == 0)
    def _init():
        acc_ref[...] = jnp.zeros_like(acc_ref)

    # ---- hot loop -----------------------------------------------------------
    d = x_ref.shape[-1]
    x2d = x_ref[...].reshape(block_b * tile_s, d)                 # (bb*ts, D)
    h = jnp.dot(x2d, w1_ref[...],
                preferred_element_type=jnp.float32)               # MXU, f32 acc
    h = jnp.maximum(h + b1_ref[...], 0.0)                         # VPU ReLU
    h1 = h.shape[-1]

    if sub == 8:
        # Fold groups of 8 rows with VPU adds; keep all 8 sublanes live so the
        # hot loop has no cross-sublane reduce and no 1-sublane masked store.
        partial = h.reshape(block_b, tile_s // 8, 8, h1).sum(axis=1)
    else:
        partial = h.reshape(block_b, tile_s, h1).sum(axis=1, keepdims=True)
    acc_ref[...] += partial                                       # (bb, sub, H1)

    # ---- finalize: W2 / b2 applied exactly once (mean-pool linearity) -------
    @pl.when(s_idx == pl.num_programs(1) - 1)
    def _fin():
        pooled = acc_ref[...].sum(axis=1) * (1.0 / set_size)      # (bb, H1)
        y = jnp.dot(pooled, w2_ref[...],
                    preferred_element_type=jnp.float32) + b2_ref[...]
        o_ref[...] = y[:, None, :].astype(o_ref.dtype)            # (bb, 1, H)


# --------------------------------------------------------------------------- #
# Tiling heuristics (VMEM-budget-aware)
# --------------------------------------------------------------------------- #
def _vmem_budget_bytes():
    """Scoped-VMEM budget (bytes) derived from the running device."""
    cap = 64 * _MIB
    try:
        info = pltpu.get_tpu_info()
        cap = int(getattr(info, "vmem_capacity_bytes", cap))
    except Exception:
        pass
    budget = min(64 * _MIB, max(16 * _MIB, cap // 2))
    return min(budget, (cap * 3) // 4)


def _largest_mult8_divisor(s, cap):
    t = (min(cap, s) // 8) * 8
    while t >= 8:
        if s % t == 0:
            return t
        t -= 8
    return None


def _pick_tile_s(S, D, x_itemsize, budget, reserve):
    rows_budget = max(8, (budget - reserve) // (2 * D * x_itemsize))
    cap = int(max(8, min(rows_budget, 2048)))
    if S <= cap:
        return S, rows_budget
    t = _largest_mult8_divisor(S, cap)
    # TODO(synk): no remainder-tile path; if S has no multiple-of-8 divisor <= cap
    # we fall back to one full-S tile (correct, may exceed the VMEM budget).
    return (t if t is not None else S), rows_budget


def _pick_block_b(B, tile_s, rows_budget):
    target_rows = int(min(rows_budget, max(512, tile_s)))
    bb = max(1, target_rows // tile_s)
    bb = min(bb, B)
    if B >= 2:                       # keep >=2 parallel batch blocks (v7x megacore)
        bb = max(1, min(bb, B // 2))
    if tile_s % 8 != 0:              # flattened (bb*ts, D) view needs 8-row tiles
        bb = 1
    while bb > 1 and B % bb != 0:
        bb -= 1
    return bb


# --------------------------------------------------------------------------- #
# Wrapper
# --------------------------------------------------------------------------- #
def parallel_mbc_extract_and_pool(x, w1, b1, w2, b2, *, tile_s=None, block_b=None,
                                  compute_dtype=jnp.float32,
                                  single_buffer_weights=True):
    """x: (B, S, D) -> (B, H).
    Equals mean_S(ReLU(x @ W1 + b1) @ W2 + b2) == mean_S(ReLU(x @ W1 + b1)) @ W2 + b2.
    """
    B, S, D = x.shape
    H1 = w1.shape[1]
    H = w2.shape[1]

    budget = _vmem_budget_bytes()
    itemsize = np.dtype(compute_dtype).itemsize
    reserve = 2 * 4 * (D * H1 + H1 + H1 * H + H) + _MIB   # weights (worst case 2x) + slack
    auto_ts, rows_budget = _pick_tile_s(S, D, itemsize, budget, reserve)
    tile_s = auto_ts if tile_s is None else tile_s
    assert S % tile_s == 0, "tile_s must divide S"
    assert tile_s % 8 == 0 or tile_s == S, "tile_s must be a multiple of 8 (or == S)"
    block_b = _pick_block_b(B, tile_s, rows_budget) if block_b is None else block_b
    assert B % block_b == 0, "block_b must divide B"
    if block_b > 1 and tile_s % 8 != 0:
        block_b = 1
    sub = 8 if tile_s % 8 == 0 else 1

    # Hoist every dtype cast out of the kernel body.
    xc = x if x.dtype == compute_dtype else x.astype(compute_dtype)
    w1c = w1 if w1.dtype == compute_dtype else w1.astype(compute_dtype)
    b1c = b1.astype(jnp.float32)
    w2c = w2.astype(jnp.float32)
    b2c = b2.astype(jnp.float32)

    grid = (B // block_b, S // tile_s)
    kernel = functools.partial(_extract_and_pool_kernel, set_size=S,
                               block_b=block_b, tile_s=tile_s, sub=sub)

    def build(single_buffer):
        def const_spec(shape):
            ndim = len(shape)
            index_map = lambda bi, si: (0,) * ndim
            if single_buffer:
                # Constant-index operands: single-buffer to halve their VMEM use.
                return pl.BlockSpec(shape, index_map, pipeline_mode=pl.Buffered(1))
            return pl.BlockSpec(shape, index_map)

        return pl.pallas_call(
            kernel,
            out_shape=jax.ShapeDtypeStruct((B, 1, H), x.dtype),
            grid_spec=pltpu.PrefetchScalarGridSpec(
                num_scalar_prefetch=0,
                grid=grid,
                in_specs=[
                    pl.BlockSpec((block_b, tile_s, D), lambda bi, si: (bi, si, 0)),
                    const_spec((D, H1)),     # W1
                    const_spec((1, H1)),     # b1
                    const_spec((H1, H)),     # W2
                    const_spec((1, H)),      # b2
                ],
                out_specs=pl.BlockSpec((block_b, 1, H), lambda bi, si: (bi, 0, 0)),
                scratch_shapes=[pltpu.VMEM((block_b, sub, H1), jnp.float32)],
            ),
            compiler_params=pltpu.CompilerParams(
                dimension_semantics=("parallel", "arbitrary"),
                vmem_limit_bytes=int(budget)),
        )

    args = (xc, w1c, b1c, w2c, b2c)
    out = None
    if single_buffer_weights:
        try:
            out = build(True)(*args)
        except Exception:
            out = None   # pl.Buffered(1) unsupported here -> default double buffering
    if out is None:
        out = build(False)(*args)
    return out[:, 0, :]                                            # (B, H)


# --------------------------------------------------------------------------- #
# Reference + demo
# --------------------------------------------------------------------------- #
def _reference(x, w1, b1, w2, b2):
    h = jnp.maximum(jnp.einsum("bsd,dh->bsh", x, w1) + b1[0], 0.0)
    y = jnp.einsum("bsh,hk->bsk", h, w2) + b2[0]
    return jnp.mean(y, axis=1)


def _make(B, S, D, H1, H, key):
    kx, k1, k2, k3, k4 = jax.random.split(key, 5)
    x = jax.random.normal(kx, (B, S, D), dtype=jnp.float32)
    w1 = jax.random.normal(k1, (D, H1), dtype=jnp.float32) * (1.0 / jnp.sqrt(D))
    b1 = jax.random.normal(k2, (1, H1), dtype=jnp.float32) * 0.01
    w2 = jax.random.normal(k3, (H1, H), dtype=jnp.float32) * (1.0 / jnp.sqrt(H1))
    b2 = jax.random.normal(k4, (1, H), dtype=jnp.float32) * 0.01
    return x, w1, b1, w2, b2


if __name__ == "__main__":
    # Case 1: small set (module's toy shapes); whole-set tile.
    x, w1, b1, w2, b2 = _make(2, 16, 32, 64, 32, jax.random.PRNGKey(0))
    out = jax.block_until_ready(parallel_mbc_extract_and_pool(x, w1, b1, w2, b2))
    ref = _reference(x, w1, b1, w2, b2)
    assert out.shape == (2, 32)
    assert jnp.allclose(out, ref, atol=1e-4, rtol=1e-4), "case 1 mismatch"

    # Case 2: exercises batch blocking (block_b=2, flattened layer-1 matmul).
    x, w1, b1, w2, b2 = _make(4, 128, 32, 64, 32, jax.random.PRNGKey(1))
    out = jax.block_until_ready(parallel_mbc_extract_and_pool(x, w1, b1, w2, b2))
    ref = _reference(x, w1, b1, w2, b2)
    assert out.shape == (4, 32)
    assert jnp.allclose(out, ref, atol=1e-4, rtol=1e-4), "case 2 mismatch"

    # Case 3: forces a multi-step S reduction (accumulator init/accumulate/finalize).
    x, w1, b1, w2, b2 = _make(2, 64, 32, 64, 32, jax.random.PRNGKey(2))
    out = jax.block_until_ready(
        parallel_mbc_extract_and_pool(x, w1, b1, w2, b2, tile_s=8))
    ref = _reference(x, w1, b1, w2, b2)
    assert jnp.allclose(out, ref, atol=1e-4, rtol=1e-4), "case 3 mismatch"

    print("KERNEL_OK")
</pallas_src>

<mosaic_0001>
module attributes {stable_mosaic.version = 11 : i64} {
  func.func @_extract_and_pool_kernel(%arg0: i32, %arg1: i32, %arg2: memref<1x16x32xf32, #tpu.memory_space<vmem>>, %arg3: memref<32x64xf32, #tpu.memory_space<vmem>>, %arg4: memref<1x64xf32, #tpu.memory_space<vmem>>, %arg5: memref<64x32xf32, #tpu.memory_space<vmem>>, %arg6: memref<1x32xf32, #tpu.memory_space<vmem>>, %arg7: memref<1x1x32xf32, #tpu.memory_space<vmem>>, %arg8: memref<1x8x64xf32, #tpu.memory_space<vmem>>) attributes {dimension_semantics = [#tpu.dimension_semantics<parallel>, #tpu.dimension_semantics<arbitrary>], iteration_bounds = array<i64: 2, 1>, scalar_prefetch = 0 : i64, scratch_operands = 1 : i64, tpu.core_type = #tpu.core_type<tc>, window_params = [{transform_indices = @transform_0, window_bounds = array<i64: 1, 16, 32>}, {pipeline_mode = #tpu.pipeline_mode<synchronous>, transform_indices = @transform_1, window_bounds = array<i64: 32, 64>}, {pipeline_mode = #tpu.pipeline_mode<synchronous>, transform_indices = @transform_2, window_bounds = array<i64: 1, 64>}, {pipeline_mode = #tpu.pipeline_mode<synchronous>, transform_indices = @transform_3, window_bounds = array<i64: 64, 32>}, {pipeline_mode = #tpu.pipeline_mode<synchronous>, transform_indices = @transform_4, window_bounds = array<i64: 1, 32>}, {transform_indices = @transform_5, window_bounds = array<i64: 1, 1, 32>}]} {
    %c0_i32 = arith.constant 0 : i32
    %0 = arith.cmpi eq, %arg1, %c0_i32 : i32
    %1 = arith.extui %0 : i1 to i32
    %c0_i32_0 = arith.constant 0 : i32
    %2 = arith.cmpi ne, %1, %c0_i32_0 : i32
    scf.if %2 {
      %cst_17 = arith.constant 0.000000e+00 : f32
      %20 = vector.broadcast %cst_17 : f32 to vector<1x8x64xf32>
      %c0_18 = arith.constant 0 : index
      %c0_19 = arith.constant 0 : index
      %c0_20 = arith.constant 0 : index
      %21 = vector.load %arg8[%c0_18, %c0_19, %c0_20] : memref<1x8x64xf32, #tpu.memory_space<vmem>>, vector<1x8x64xf32>
      tpu.vector_store %arg8[%c0_18, %c0_19, %c0_20], %20 {strides = array<i32>} : memref<1x8x64xf32, #tpu.memory_space<vmem>>, vector<1x8x64xf32>,
    } else {
    }
    %c0 = arith.constant 0 : index
    %c0_1 = arith.constant 0 : index
    %c0_2 = arith.constant 0 : index
    %3 = vector.load %arg2[%c0, %c0_1, %c0_2] : memref<1x16x32xf32, #tpu.memory_space<vmem>>, vector<1x16x32xf32>
    %4 = vector.shape_cast %3 : vector<1x16x32xf32> to vector<16x32xf32>
    %c0_3 = arith.constant 0 : index
    %c0_4 = arith.constant 0 : index
    %5 = vector.load %arg3[%c0_3, %c0_4] : memref<32x64xf32, #tpu.memory_space<vmem>>, vector<32x64xf32>
    %cst = arith.constant dense<0.000000e+00> : vector<16x64xf32>
    %6 = tpu.matmul %4, %5, %cst {dimension_numbers = #tpu.dot_dimension_numbers<[1], [0], [0], [1], [0, 0, 1, 1], [], []>} : vector<16x32xf32>, vector<32x64xf32>, vector<16x64xf32> -> vector<16x64xf32>
    %c0_5 = arith.constant 0 : index
    %c0_6 = arith.constant 0 : index
    %7 = vector.load %arg4[%c0_5, %c0_6] : memref<1x64xf32, #tpu.memory_space<vmem>>, vector<1x64xf32>
    %8 = vector.broadcast %7 : vector<1x64xf32> to vector<16x64xf32>
    %9 = arith.addf %6, %8 : vector<16x64xf32>
    %cst_7 = arith.constant 0.000000e+00 : f32
    %10 = vector.broadcast %cst_7 : f32 to vector<16x64xf32>
    %11 = arith.maximumf %9, %10 : vector<16x64xf32>
    %12 = vector.shape_cast %11 : vector<16x64xf32> to vector<1x2x8x64xf32>
    %cst_8 = arith.constant dense<0.000000e+00> : vector<1x8x64xf32>
    %13 = vector.multi_reduction <add>, %12, %cst_8 [1] : vector<1x2x8x64xf32> to vector<1x8x64xf32>
    %c0_9 = arith.constant 0 : index
    %c0_10 = arith.constant 0 : index
    %c0_11 = arith.constant 0 : index
    %14 = vector.load %arg8[%c0_9, %c0_10, %c0_11] : memref<1x8x64xf32, #tpu.memory_space<vmem>>, vector<1x8x64xf32>
    %15 = arith.addf %14, %13 : vector<1x8x64xf32>
    %c0_12 = arith.constant 0 : index
    %c0_13 = arith.constant 0 : index
    %c0_14 = arith.constant 0 : index
    %16 = vector.load %arg8[%c0_12, %c0_13, %c0_14] : memref<1x8x64xf32, #tpu.memory_space<vmem>>, vector<1x8x64xf32>
    tpu.vector_store %arg8[%c0_12, %c0_13, %c0_14], %15 {strides = array<i32>} : memref<1x8x64xf32, #tpu.memory_space<vmem>>, vector<1x8x64xf32>,
    %c0_i32_15 = arith.constant 0 : i32
    %17 = arith.cmpi eq, %arg1, %c0_i32_15 : i32
    %18 = arith.extui %17 : i1 to i32
    %c0_i32_16 = arith.constant 0 : i32
    %19 = arith.cmpi ne, %18, %c0_i32_16 : i32
    scf.if %19 {
      %c0_17 = arith.constant 0 : index
      %c0_18 = arith.constant 0 : index
      %c0_19 = arith.constant 0 : index
      %20 = vector.load %arg8[%c0_17, %c0_18, %c0_19] : memref<1x8x64xf32, #tpu.memory_space<vmem>>, vector<1x8x64xf32>
      %cst_20 = arith.constant dense<0.000000e+00> : vector<1x64xf32>
      %21 = vector.multi_reduction <add>, %20, %cst_20 [1] : vector<1x8x64xf32> to vector<1x64xf32>
      %cst_21 = arith.constant 6.250000e-02 : f32
      %22 = vector.broadcast %cst_21 : f32 to vector<1x64xf32>
      %23 = arith.mulf %21, %22 : vector<1x64xf32>
      %c0_22 = arith.constant 0 : index
      %c0_23 = arith.constant 0 : index
      %24 = vector.load %arg5[%c0_22, %c0_23] : memref<64x32xf32, #tpu.memory_space<vmem>>, vector<64x32xf32>
      %cst_24 = arith.constant dense<0.000000e+00> : vector<1x32xf32>
      %25 = tpu.matmul %23, %24, %cst_24 {dimension_numbers = #tpu.dot_dimension_numbers<[1], [0], [0], [1], [0, 0, 1, 1], [], []>} : vector<1x64xf32>, vector<64x32xf32>, vector<1x32xf32> -> vector<1x32xf32>
      %c0_25 = arith.constant 0 : index
      %c0_26 = arith.constant 0 : index
      %26 = vector.load %arg6[%c0_25, %c0_26] : memref<1x32xf32, #tpu.memory_space<vmem>>, vector<1x32xf32>
      %27 = arith.addf %25, %26 : vector<1x32xf32>
      %28 = vector.shape_cast %27 : vector<1x32xf32> to vector<1x1x32xf32>
      %c0_27 = arith.constant 0 : index
      %c0_28 = arith.constant 0 : index
      %c0_29 = arith.constant 0 : index
      %29 = vector.load %arg7[%c0_27, %c0_28, %c0_29] : memref<1x1x32xf32, #tpu.memory_space<vmem>>, vector<1x1x32xf32>
      tpu.vector_store %arg7[%c0_27, %c0_28, %c0_29], %28 {strides = array<i32>} : memref<1x1x32xf32, #tpu.memory_space<vmem>>, vector<1x1x32xf32>,
    } else {
    }
    return
  }
  func.func @transform_0(%arg0: i32, %arg1: i32) -> (i32, i32, i32) {
    %c0_i32 = arith.constant 0 : i32
    %c0_i32_0 = arith.constant 0 : i32
    return %arg0, %arg1, %c0_i32 : i32, i32, i32
  }
  func.func @transform_1(%arg0: i32, %arg1: i32) -> (i32, i32) {
    %c0_i32 = arith.constant 0 : i32
    %c0_i32_0 = arith.constant 0 : i32
    %c0_i32_1 = arith.constant 0 : i32
    return %c0_i32, %c0_i32_0 : i32, i32
  }
  func.func @transform_2(%arg0: i32, %arg1: i32) -> (i32, i32) {
    %c0_i32 = arith.constant 0 : i32
    %c0_i32_0 = arith.constant 0 : i32
    %c0_i32_1 = arith.constant 0 : i32
    return %c0_i32, %c0_i32_0 : i32, i32
  }
  func.func @transform_3(%arg0: i32, %arg1: i32) -> (i32, i32) {
    %c0_i32 = arith.constant 0 : i32
    %c0_i32_0 = arith.constant 0 : i32
    %c0_i32_1 = arith.constant 0 : i32
    return %c0_i32, %c0_i32_0 : i32, i32
  }
  func.func @transform_4(%arg0: i32, %arg1: i32) -> (i32, i32) {
    %c0_i32 = arith.constant 0 : i32
    %c0_i32_0 = arith.constant 0 : i32
    %c0_i32_1 = arith.constant 0 : i32
    return %c0_i32, %c0_i32_0 : i32, i32
  }
  func.func @transform_5(%arg0: i32, %arg1: i32) -> (i32, i32, i32) {
    %c0_i32 = arith.constant 0 : i32
    %c0_i32_0 = arith.constant 0 : i32
    %c0_i32_1 = arith.constant 0 : i32
    return %arg0, %c0_i32, %c0_i32_0 : i32, i32, i32
  }
}

module attributes {stable_mosaic.version = 11 : i64} {
  func.func @_extract_and_pool_kernel(%arg0: i32, %arg1: i32, %arg2: memref<1x16x32xf32, #tpu.memory_space<vmem>>, %arg3: memref<32x64xf32, #tpu.memory_space<vmem>>, %arg4: memref<1x64xf32, #tpu.memory_space<vmem>>, %arg5: memref<64x32xf32, #tpu.memory_space<vmem>>, %arg6: memref<1x32xf32, #tpu.memory_space<vmem>>, %arg7: memref<1x1x32xf32, #tpu.memory_space<vmem>>, %arg8: memref<1x8x64xf32, #tpu.memory_space<vmem>>) attributes {dimension_semantics = [#tpu.dimension_semantics<parallel>, #tpu.dimension_semantics<arbitrary>], iteration_bounds = array<i64: 2, 1>, scalar_prefetch = 0 : i64, scratch_operands = 1 : i64, tpu.core_type = #tpu.core_type<tc>, window_params = [{transform_indices = @transform_0, window_bounds = array<i64: 1, 16, 32>}, {pipeline_mode = #tpu.pipeline_mode<synchronous>, transform_indices = @transform_1, window_bounds = array<i64: 32, 64>}, {pipeline_mode = #tpu.pipeline_mode<synchronous>, transform_indices = @transform_2, window_bounds = array<i64: 1, 64>}, {pipeline_mode = #tpu.pipeline_mode<synchronous>, transform_indices = @transform_3, window_bounds = array<i64: 64, 32>}, {pipeline_mode = #tpu.pipeline_mode<synchronous>, transform_indices = @transform_4, window_bounds = array<i64: 1, 32>}, {transform_indices = @transform_5, window_bounds = array<i64: 1, 1, 32>}]} {
    %c0_i32 = arith.constant 0 : i32
    %0 = arith.cmpi eq, %arg1, %c0_i32 : i32
    %1 = arith.extui %0 : i1 to i32
    %c0_i32_0 = arith.constant 0 : i32
    %2 = arith.cmpi ne, %1, %c0_i32_0 : i32
    scf.if %2 {
      %cst_17 = arith.constant 0.000000e+00 : f32
      %20 = vector.broadcast %cst_17 : f32 to vector<1x8x64xf32>
      %c0_18 = arith.constant 0 : index
      %c0_19 = arith.constant 0 : index
      %c0_20 = arith.constant 0 : index
      %21 = vector.load %arg8[%c0_18, %c0_19, %c0_20] : memref<1x8x64xf32, #tpu.memory_space<vmem>>, vector<1x8x64xf32>
      tpu.vector_store %arg8[%c0_18, %c0_19, %c0_20], %20 {strides = array<i32>} : memref<1x8x64xf32, #tpu.memory_space<vmem>>, vector<1x8x64xf32>,
    } else {
    }
    %c0 = arith.constant 0 : index
    %c0_1 = arith.constant 0 : index
    %c0_2 = arith.constant 0 : index
    %3 = vector.load %arg2[%c0, %c0_1, %c0_2] : memref<1x16x32xf32, #tpu.memory_space<vmem>>, vector<1x16x32xf32>
    %4 = vector.shape_cast %3 : vector<1x16x32xf32> to vector<16x32xf32>
    %c0_3 = arith.constant 0 : index
    %c0_4 = arith.constant 0 : index
    %5 = vector.load %arg3[%c0_3, %c0_4] : memref<32x64xf32, #tpu.memory_space<vmem>>, vector<32x64xf32>
    %cst = arith.constant dense<0.000000e+00> : vector<16x64xf32>
    %6 = tpu.matmul %4, %5, %cst {dimension_numbers = #tpu.dot_dimension_numbers<[1], [0], [0], [1], [0, 0, 1, 1], [], []>} : vector<16x32xf32>, vector<32x64xf32>, vector<16x64xf32> -> vector<16x64xf32>
    %c0_5 = arith.constant 0 : index
    %c0_6 = arith.constant 0 : index
    %7 = vector.load %arg4[%c0_5, %c0_6] : memref<1x64xf32, #tpu.memory_space<vmem>>, vector<1x64xf32>
    %8 = vector.broadcast %7 : vector<1x64xf32> to vector<16x64xf32>
    %9 = arith.addf %6, %8 : vector<16x64xf32>
    %cst_7 = arith.constant 0.000000e+00 : f32
    %10 = vector.broadcast %cst_7 : f32 to vector<16x64xf32>
    %11 = arith.maximumf %9, %10 : vector<16x64xf32>
    %12 = vector.shape_cast %11 : vector<16x64xf32> to vector<1x2x8x64xf32>
    %cst_8 = arith.constant dense<0.000000e+00> : vector<1x8x64xf32>
    %13 = vector.multi_reduction <add>, %12, %cst_8 [1] : vector<1x2x8x64xf32> to vector<1x8x64xf32>
    %c0_9 = arith.constant 0 : index
    %c0_10 = arith.constant 0 : index
    %c0_11 = arith.constant 0 : index
    %14 = vector.load %arg8[%c0_9, %c0_10, %c0_11] : memref<1x8x64xf32, #tpu.memory_space<vmem>>, vector<1x8x64xf32>
    %15 = arith.addf %14, %13 : vector<1x8x64xf32>
    %c0_12 = arith.constant 0 : index
    %c0_13 = arith.constant 0 : index
    %c0_14 = arith.constant 0 : index
    %16 = vector.load %arg8[%c0_12, %c0_13, %c0_14] : memref<1x8x64xf32, #tpu.memory_space<vmem>>, vector<1x8x64xf32>
    tpu.vector_store %arg8[%c0_12, %c0_13, %c0_14], %15 {strides = array<i32>} : memref<1x8x64xf32, #tpu.memory_space<vmem>>, vector<1x8x64xf32>,
    %c0_i32_15 = arith.constant 0 : i32
    %17 = arith.cmpi eq, %arg1, %c0_i32_15 : i32
    %18 = arith.extui %17 : i1 to i32
    %c0_i32_16 = arith.constant 0 : i32
    %19 = arith.cmpi ne, %18, %c0_i32_16 : i32
    scf.if %19 {
      %c0_17 = arith.constant 0 : index
      %c0_18 = arith.constant 0 : index
      %c0_19 = arith.constant 0 : index
      %20 = vector.load %arg8[%c0_17, %c0_18, %c0_19] : memref<1x8x64xf32, #tpu.memory_space<vmem>>, vector<1x8x64xf32>
      %cst_20 = arith.constant dense<0.000000e+00> : vector<1x64xf32>
      %21 = vector.multi_reduction <add>, %20, %cst_20 [1] : vector<1x8x64xf32> to vector<1x64xf32>
      %cst_21 = arith.constant 6.250000e-02 : f32
      %22 = vector.broadcast %cst_21 : f32 to vector<1x64xf32>
      %23 = arith.mulf %21, %22 : vector<1x64xf32>
      %c0_22 = arith.constant 0 : index
      %c0_23 = arith.constant 0 : index
      %24 = vector.load %arg5[%c0_22, %c0_23] : memref<64x32xf32, #tpu.memory_space<vmem>>, vector<64x32xf32>
      %cst_24 = arith.constant dense<0.000000e+00> : vector<1x32xf32>
      %25 = tpu.matmul %23, %24, %cst_24 {dimension_numbers = #tpu.dot_dimension_numbers<[1], [0], [0], [1], [0, 0, 1, 1], [], []>} : vector<1x64xf32>, vector<64x32xf32>, vector<1x32xf32> -> vector<1x32xf32>
      %c0_25 = arith.constant 0 : index
      %c0_26 = arith.constant 0 : index
      %26 = vector.load %arg6[%c0_25, %c0_26] : memref<1x32xf32, #tpu.memory_space<vmem>>, vector<1x32xf32>
      %27 = arith.addf %25, %26 : vector<1x32xf32>
      %28 = vector.shape_cast %27 : vector<1x32xf32> to vector<1x1x32xf32>
      %c0_27 = arith.constant 0 : index
      %c0_28 = arith.constant 0 : index
      %c0_29 = arith.constant 0 : index
      %29 = vector.load %arg7[%c0_27, %c0_28, %c0_29] : memref<1x1x32xf32, #tpu.memory_space<vmem>>, vector<1x1x32xf32>
      tpu.vector_store %arg7[%c0_27, %c0_28, %c0_29], %28 {strides = array<i32>} : memref<1x1x32xf32, #tpu.memory_space<vmem>>, vector<1x1x32xf32>,
    } else {
    }
    return
  }
  func.func @transform_0(%arg0: i32, %arg1: i32) -> (i32, i32, i32) {
    %c0_i32 = arith.constant 0 : i32
    %c0_i32_0 = arith.constant 0 : i32
    return %arg0, %arg1, %c0_i32 : i32, i32, i32
  }
  func.func @transform_1(%arg0: i32, %arg1: i32) -> (i32, i32) {
    %c0_i32 = arith.constant 0 : i32
    %c0_i32_0 = arith.constant 0 : i32
    %c0_i32_1 = arith.constant 0 : i32
    return %c0_i32, %c0_i32_0 : i32, i32
  }
  func.func @transform_2(%arg0: i32, %arg1: i32) -> (i32, i32) {
    %c0_i32 = arith.constant 0 : i32
    %c0_i32_0 = arith.constant 0 : i32
    %c0_i32_1 = arith.constant 0 : i32
    return %c0_i32, %c0_i32_0 : i32, i32
  }
  func.func @transform_3(%arg0: i32, %arg1: i32) -> (i32, i32) {
    %c0_i32 = arith.constant 0 : i32
    %c0_i32_0 = arith.constant 0 : i32
    %c0_i32_1 = arith.constant 0 : i32
    return %c0_i32, %c0_i32_0 : i32, i32
  }
  func.func @transform_4(%arg0: i32, %arg1: i32) -> (i32, i32) {
    %c0_i32 = arith.constant 0 : i32
    %c0_i32_0 = arith.constant 0 : i32
    %c0_i32_1 = arith.constant 0 : i32
    return %c0_i32, %c0_i32_0 : i32, i32
  }
  func.func @transform_5(%arg0: i32, %arg1: i32) -> (i32, i32, i32) {
    %c0_i32 = arith.constant 0 : i32
    %c0_i32_0 = arith.constant 0 : i32
    %c0_i32_1 = arith.constant 0 : i32
    return %arg0, %c0_i32, %c0_i32_0 : i32, i32, i32
  }
}

</mosaic_0001>

<llo_original>
// kernel: tpu_custom_call.1
$region0: #{tpu_custom_call.1}
  #allocation0 [shape = 'u32[]', space=smem, size = 0x4, offset = 0x4, fixed_abs, tag = 'smem constant byte address 0x4 - core index']
  #allocation1 [shape = 'u32[144,128]{1,0:T(1,128)}', space=vmem, size = 0x12000, scoped, tag = 'internal scratch']
  #allocation2 [shape = 'f32[1,8,64]{2,1,0:T(8,128)}', space=vmem, size = 0x1000, scoped, tag = 'scratch operand']
  %s0 = inlined_call_operand.vmem [shape: f32[2,16,32], index: 0, kind: input, shape index: {}]
  %s1 = inlined_call_operand.vmem [shape: f32[32,64], index: 1, kind: input, shape index: {}]
  %s2 = inlined_call_operand.vmem [shape: f32[1,64], index: 2, kind: input, shape index: {}]
  %s3 = inlined_call_operand.vmem [shape: f32[64,32], index: 3, kind: input, shape index: {}]
  %s4 = inlined_call_operand.vmem [shape: f32[1,32], index: 4, kind: input, shape index: {}]
  %s5 = inlined_call_operand.hbm [shape: f32[2,1,32], index: 5, kind: output, shape index: {}]
  %s6 = sld [smem:[#allocation0]]
  $region61: #{tpu_custom_call.1} parent=0
    _
  %s8 = ssub.s32 1, %s6
  %s9 = scalar_select 0, %s8, %s6
  $region1: #{tpu_custom_call.1} parent=0
    #allocation3 [shape = 'u8[1024]{0}', space=vmem, size = 0x400, scoped, tag = 'output window, operand 0']
    #allocation4 [shape = 's32[2]{0}', space=sflag, size = 0x8, scoped, tag = 'scoped memory for tpu_custom_call.1']
    %10 = vsyncpa [#allocation4], 0
    %s11 = scalar_lea.sflag [#allocation4], 1
    %12 = vsyncpa %s11, 0
    loop: start=0, step=1, limit=4
    $region2: #{tpu_custom_call.1} parent=1 // loop_pre_header
      _
    $region3: #{tpu_custom_call.1} parent=1 // loop_header
      %s14 = sphi 0, %s18
      %p15 = scmp.ge.s32.totalorder %s14, 4
      %s21 = sphi 0, %s33
      %s22 = sphi 0, %s29
      %s23 = sphi 0, %s21
      %s24 = sphi 0, %s22
      %s25 = sphi 0, %s23
      %s26 = sphi 0, %s24
      %s38 = sphi 0, %s40
      %s41 = sphi 0, %s38
      %s42 = sphi 0, %s41
      %s58 = sphi 0, %s42
      %s62 = sphi 0, %s62
      %s64 = sphi 0, %s62
      %s65 = sphi 0, %s64
      %s79 = sphi 0, %s65
      %s83 = sphi 0, %s83
      %s85 = sphi 0, %s83
      %s86 = sphi 0, %s85
      %s100 = sphi 0, %s86
      %s104 = sphi 0, %s104
      %s106 = sphi 0, %s104
      %s107 = sphi 0, %s106
      %s121 = sphi 0, %s107
      %s125 = sphi 0, %s125
      %s127 = sphi 0, %s125
      %s128 = sphi 0, %s127
      %s142 = sphi 0, %s128
      %s148 = sphi 0, %s150
      %s151 = sphi 0, %s148
      %s152 = sphi 0, %s151
      %s168 = sphi 0, %s152
    $region4: #{tpu_custom_call.1} parent=1 // loop_header_branch
      %17 = sbr.rel (%p15) target = $region8
    $region5: #{tpu_custom_call.1} parent=1 // loop_body
      %s19 = ssub.s32 %s14, 1
      %s20 = ssub.s32 %s14, 2
      %s27 = sadd.s32 1, %s22
      %p28 = scmp.ge.s32.totalorder %s27, 1
      %s29 = scalar_select %p28, 0, %s27
      %s30 = sadd.s32 1, %s21
      %s31 = scalar_select %p28, %s30, %s21
      %p32 = scmp.ge.s32.totalorder %s31, 2
      %s33 = scalar_select %p32, 0, %s31
      %s34 = ssub.s32 %s21, %s33
      %s35 = ssub.s32 %s22, %s29
      %s36 = sor.u32 %s34, %s35
      %p37 = scmp.eq.s32.totalorder %s36, 0
      %s39 = sadd.s32 %s38, 1
      %s40 = scalar_select %p37, %s38, %s39
      %p43 = pneg %p37
      %p44 = scmp.eq.s32.totalorder %s14, 1
      %p45 = por %p43, %p44
      %p46 = scmp.ne.s32.totalorder %s38, %s41
      %p47 = scmp.eq.s32.totalorder %s14, 0
      %p48 = por %p46, %p47
      %p49 = scmp.ne.s32.totalorder %s38, %s41
      %p50 = scmp.eq.s32.totalorder %s19, 1
      %p51 = por %p49, %p50
      %p52 = scmp.ne.s32.totalorder %s41, %s42
      %p53 = scmp.eq.s32.totalorder %s19, 0
      %p54 = por %p52, %p53
      %p55 = scmp.ne.s32.totalorder %s41, %s42
      %p56 = scmp.eq.s32.totalorder %s20, 1
      %p57 = por %p55, %p56
      %p59 = scmp.ne.s32.totalorder %s42, %s58
      %p60 = scmp.eq.s32.totalorder %s20, 0
      %p61 = por %p59, %p60
      %s63 = sadd.s32 %s62, 1
      %p66 = scmp.eq.s32.totalorder %s14, 1
      %p67 = scmp.ne.s32.totalorder %s62, %s64
      %p68 = scmp.eq.s32.totalorder %s14, 0
      %p69 = por %p67, %p68
      %p70 = scmp.ne.s32.totalorder %s62, %s64
      %p71 = scmp.eq.s32.totalorder %s19, 1
      %p72 = por %p70, %p71
      %p73 = scmp.ne.s32.totalorder %s64, %s65
      %p74 = scmp.eq.s32.totalorder %s19, 0
      %p75 = por %p73, %p74
      %p76 = scmp.ne.s32.totalorder %s64, %s65
      %p77 = scmp.eq.s32.totalorder %s20, 1
      %p78 = por %p76, %p77
      %p80 = scmp.ne.s32.totalorder %s65, %s79
      %p81 = scmp.eq.s32.totalorder %s20, 0
      %p82 = por %p80, %p81
      %s84 = sadd.s32 %s83, 1
      %p87 = scmp.eq.s32.totalorder %s14, 1
      %p88 = scmp.ne.s32.totalorder %s83, %s85
      %p89 = scmp.eq.s32.totalorder %s14, 0
      %p90 = por %p88, %p89
      %p91 = scmp.ne.s32.totalorder %s83, %s85
      %p92 = scmp.eq.s32.totalorder %s19, 1
      %p93 = por %p91, %p92
      %p94 = scmp.ne.s32.totalorder %s85, %s86
      %p95 = scmp.eq.s32.totalorder %s19, 0
      %p96 = por %p94, %p95
      %p97 = scmp.ne.s32.totalorder %s85, %s86
      %p98 = scmp.eq.s32.totalorder %s20, 1
      %p99 = por %p97, %p98
      %p101 = scmp.ne.s32.totalorder %s86, %s100
      %p102 = scmp.eq.s32.totalorder %s20, 0
      %p103 = por %p101, %p102
      %s105 = sadd.s32 %s104, 1
      %p108 = scmp.eq.s32.totalorder %s14, 1
      %p109 = scmp.ne.s32.totalorder %s104, %s106
      %p110 = scmp.eq.s32.totalorder %s14, 0
      %p111 = por %p109, %p110
      %p112 = scmp.ne.s32.totalorder %s104, %s106
      %p113 = scmp.eq.s32.totalorder %s19, 1
      %p114 = por %p112, %p113
      %p115 = scmp.ne.s32.totalorder %s106, %s107
      %p116 = scmp.eq.s32.totalorder %s19, 0
      %p117 = por %p115, %p116
      %p118 = scmp.ne.s32.totalorder %s106, %s107
      %p119 = scmp.eq.s32.totalorder %s20, 1
      %p120 = por %p118, %p119
      %p122 = scmp.ne.s32.totalorder %s107, %s121
      %p123 = scmp.eq.s32.totalorder %s20, 0
      %p124 = por %p122, %p123
      %s126 = sadd.s32 %s125, 1
      %p129 = scmp.eq.s32.totalorder %s14, 1
      %p130 = scmp.ne.s32.totalorder %s125, %s127
      %p131 = scmp.eq.s32.totalorder %s14, 0
      %p132 = por %p130, %p131
      %p133 = scmp.ne.s32.totalorder %s125, %s127
      %p134 = scmp.eq.s32.totalorder %s19, 1
      %p135 = por %p133, %p134
      %p136 = scmp.ne.s32.totalorder %s127, %s128
      %p137 = scmp.eq.s32.totalorder %s19, 0
      %p138 = por %p136, %p137
      %p139 = scmp.ne.s32.totalorder %s127, %s128
      %p140 = scmp.eq.s32.totalorder %s20, 1
      %p141 = por %p139, %p140
      %p143 = scmp.ne.s32.totalorder %s128, %s142
      %p144 = scmp.eq.s32.totalorder %s20, 0
      %p145 = por %p143, %p144
      %s146 = ssub.s32 %s21, %s33
      %p147 = scmp.eq.s32.totalorder %s146, 0
      %s149 = sadd.s32 %s148, 1
      %s150 = scalar_select %p147, %s148, %s149
      %p153 = pneg %p147
      %p154 = scmp.eq.s32.totalorder %s14, 1
      %p155 = por %p153, %p154
      %p156 = scmp.ne.s32.totalorder %s148, %s151
      %p157 = scmp.eq.s32.totalorder %s14, 0
      %p158 = por %p156, %p157
      %p159 = scmp.ne.s32.totalorder %s148, %s151
      %p160 = scmp.eq.s32.totalorder %s19, 1
      %p161 = por %p159, %p160
      %p162 = scmp.ne.s32.totalorder %s151, %s152
      %p163 = scmp.eq.s32.totalorder %s19, 0
      %p164 = por %p162, %p163
      %p165 = scmp.ne.s32.totalorder %s151, %s152
      %p166 = scmp.eq.s32.totalorder %s20, 1
      %p167 = por %p165, %p166
      %p169 = scmp.ne.s32.totalorder %s152, %s168
      %p170 = scmp.eq.s32.totalorder %s20, 0
      %p171 = por %p169, %p170
      %p172 = scmp.le.s32.totalorder 1, %s14
      %p173 = scmp.lt.s32.totalorder %s14, 3
      %p174 = pnand %p172, %p173
      %p175 = pneg %p174
      // Predicated region
      $region9: #{tpu_custom_call.1} parent=5 // pred_check
        _
      $region10: #{tpu_custom_call.1} parent=5 // pred_check_branch
        %177 = sbr.rel (%p174) target = $region12
      $region11: #{tpu_custom_call.1} parent=5 // pred_region
        %s178 = ssub.s32 %s14, 1
        // Predicated region
        $region13: #{tpu_custom_call.1} parent=11 // pred_check
          %p179 = pneg %p75
        $region14: #{tpu_custom_call.1} parent=11 // pred_check_branch
          %181 = sbr.rel (%p179) target = $region16
        $region15: #{tpu_custom_call.1} parent=11 // pred_region
          _
        $region16: #{tpu_custom_call.1} parent=11 // pred_fallthru
          _
        // Predicated region
        $region17: #{tpu_custom_call.1} parent=11 // pred_check
          %p182 = pneg %p96
        $region18: #{tpu_custom_call.1} parent=11 // pred_check_branch
          %184 = sbr.rel (%p182) target = $region20
        $region19: #{tpu_custom_call.1} parent=11 // pred_region
          _
        $region20: #{tpu_custom_call.1} parent=11 // pred_fallthru
          _
        // Predicated region
        $region21: #{tpu_custom_call.1} parent=11 // pred_check
          %p185 = pneg %p117
        $region22: #{tpu_custom_call.1} parent=11 // pred_check_branch
          %187 = sbr.rel (%p185) target = $region24
        $region23: #{tpu_custom_call.1} parent=11 // pred_region
          _
        $region24: #{tpu_custom_call.1} parent=11 // pred_fallthru
          _
        // Predicated region
        $region25: #{tpu_custom_call.1} parent=11 // pred_check
          %p188 = pneg %p138
        $region26: #{tpu_custom_call.1} parent=11 // pred_check_branch
          %190 = sbr.rel (%p188) target = $region28
        $region27: #{tpu_custom_call.1} parent=11 // pred_region
          _
        $region28: #{tpu_custom_call.1} parent=11 // pred_fallthru
          _
      $region12: #{tpu_custom_call.1} parent=5 // pred_fallthru
        _
      %p191 = scmp.lt.s32.totalorder %s14, 2
      // Predicated region
      $region29: #{tpu_custom_call.1} parent=5 // pred_check
        %p192 = pneg %p191
      $region30: #{tpu_custom_call.1} parent=5 // pred_check_branch
        %194 = sbr.rel (%p192) target = $region32
      $region31: #{tpu_custom_call.1} parent=5 // pred_region
        // Predicated region
        $region33: #{tpu_custom_call.1} parent=31 // pred_check
          %p195 = pneg %p48
        $region34: #{tpu_custom_call.1} parent=31 // pred_check_branch
          %197 = sbr.rel (%p195) target = $region36
        $region35: #{tpu_custom_call.1} parent=31 // pred_region
          %s198 = smul.u32 2, %s22
          %p199 = scmp.lt.s32.totalorder %s21, 1
          %s200 = scalar_select %p199, %s21, 1
          %p201 = scmp.lt.s32.totalorder %s198, 1
          %s202 = scalar_select %p201, %s198, 1
          %s203 = smul.addr %s200, 2
          %s204 = sadd.s32 %s202, %s203
          %s205 = smul.addr %s204, 8
          %s206 = scalar_lea.vmem %s0, %s205
          %s207 = smul.u32 2, %s22
        $region36: #{tpu_custom_call.1} parent=31 // pred_fallthru
          _
      $region32: #{tpu_custom_call.1} parent=5 // pred_fallthru
        _
      %p208 = scmp.le.s32.totalorder 1, %s14
      %p209 = scmp.lt.s32.totalorder %s14, 3
      %p210 = pnand %p208, %p209
      %p211 = pneg %p210
      // Predicated region
      $region37: #{tpu_custom_call.1} parent=5 // pred_check
        _
      $region38: #{tpu_custom_call.1} parent=5 // pred_check_branch
        %213 = sbr.rel (%p210) target = $region40
      $region39: #{tpu_custom_call.1} parent=5 // pred_region
        %s214 = ssub.s32 %s14, 1
        %s215 = smul.u32 2, %s24
        %p216 = scmp.lt.s32.totalorder %s23, 1
        %s217 = scalar_select %p216, %s23, 1
        %p218 = scmp.lt.s32.totalorder %s215, 1
        %s219 = scalar_select %p218, %s215, 1
        %s220 = smul.addr %s217, 2
        %s221 = sadd.s32 %s219, %s220
        %s222 = smul.addr %s221, 8
        %s223 = scalar_lea.vmem %s0, %s222
        %p224 = pneg %p54
        %p225 = pneg %p51
        %p226 = pneg %p75
        %p227 = pneg %p72
        %p228 = pneg %p96
        %p229 = pneg %p93
        %p230 = pneg %p117
        %p231 = pneg %p114
        %p232 = pneg %p138
        %p233 = pneg %p135
        %p234 = pneg %p164
        %p235 = pneg %p161
        %s236 = sand.u32 %s151, 1
        %s237 = scalar_lea.sflag [#allocation4], %s236
        %s238 = sand.u32 %s151, 1
        %s239 = scalar_lea.vmem [#allocation3], %s238
        %s240 = smul.u32 2, %s24
        %p241 = scmp.lt.s32.totalorder %s23, 1
        %s242 = scalar_select %p241, %s23, 1
        %p243 = scmp.lt.s32.totalorder %s240, 1
        %s244 = scalar_select %p243, %s240, 1
        %s245 = smul.addr %s242, 2
        %s246 = sadd.s32 %s244, %s245
        %s247 = smul.addr %s246, 8
        %s248 = scalar_lea.vmem %s0, %s247
        %s249 = smul.u32 2, %s24
        %p250 = scmp.eq.s32.totalorder %s24, 0
        // Predicated region
        $region41: #{tpu_custom_call.1} parent=39 // pred_check
          %p251 = pneg %p250
        $region42: #{tpu_custom_call.1} parent=39 // pred_check_branch
          %253 = sbr.rel (%p251) target = $region44
        $region43: #{tpu_custom_call.1} parent=39 // pred_region
          %vm254 = vcmask 523264
          %255 = vst.msk [vmem:[#allocation2] sm:$0xff] %vm254, 0.0
        $region44: #{tpu_custom_call.1} parent=39 // pred_fallthru
          _
        %v256 = vld [vmem:[%s248] sm:$0xff]
        %v257 = vld [vmem:[%s248 + $0x8] sm:$0xff]
        %v258 = vld [vmem:[%s1] sm:$0xff]
        %v259 = vld [vmem:[%s1 + $0x8] sm:$0xff]
        %v260 = vld [vmem:[%s1 + $0x10] sm:$0xff]
        %v261 = vld [vmem:[%s1 + $0x18] sm:$0xff]
        %v262 = vld [vmem:[%s2] sm:$0x1]
        %v264 = vlaneseq
        %v265 = vshrl.u32 %v264, 7
        %v266 = vsub.s32 0, %v265
        %v267 = vrot.slane %v262, %v266
        %vm269 = vcmask 261120
        %v271 = vsel %vm269, %v256, 0
        %v274 = vsel %vm269, %v257, 0
        %276 = vmatprep.subr.mxu0 0.0
        %277 = vmatpush1.msra.mxu0 %v258
        %278 = vmatprep.subr.mxu0 0.0
        %279 = vmatpush1.msra.mxu0 %v259
        %280 = vmatprep.subr.mxu0 0.0
        %281 = vmatpush1.msra.mxu0 %v260
        %282 = vmatprep.subr.mxu0 0.0
        %283 = vmatpush1.msra.mxu0 %v261
        %284 = vmatprep.subr.mxu0 0.0
        %285 = vmatpush1.msra.mxu0 0.0
        %286 = vmatprep.subr.mxu0 0.0
        %287 = vmatpush1.msra.mxu0 0.0
        %288 = vmatprep.subr.mxu0 0.0
        %289 = vmatpush1.msra.mxu0 0.0
        %290 = vmatprep.subr.mxu0 0.0
        %291 = vmatpush1.msra.mxu0 0.0
        %292 = vmatprep.subr.mxu0 0.0
        %293 = vmatpush1.msra.mxu0 0.0
        %294 = vmatprep.subr.mxu0 0.0
        %295 = vmatpush1.msra.mxu0 0.0
        %296 = vmatprep.subr.mxu0 0.0
        %297 = vmatpush1.msra.mxu0 0.0
        %298 = vmatprep.subr.mxu0 0.0
        %299 = vmatpush1.msra.mxu0 0.0
        %300 = vmatprep.subr.mxu0 0.0
        %301 = vmatpush1.msra.mxu0 0.0
        %302 = vmatprep.subr.mxu0 0.0
        %303 = vmatpush1.msra.mxu0 0.0
        %304 = vmatprep.subr.mxu0 0.0
        %305 = vmatpush1.msra.mxu0 0.0
        %306 = vmatprep.subr.mxu0 0.0
        %307 = vmatpush1.msra.mxu0 0.0
        %308 = vmatprep.subr.mxu0 0.0
        %309 = vmatpush1.msra.mxu0 0.0
        %310 = vmatprep.subr.mxu0 0.0
        %311 = vmatpush1.msra.mxu0 0.0
        %312 = vmatprep.subr.mxu0 0.0
        %313 = vmatpush1.msra.mxu0 0.0
        %314 = vmatprep.subr.mxu0 0.0
        %315 = vmatpush1.msra.mxu0 0.0
        %316 = vmatprep.subr.mxu0 0.0
        %317 = vmatpush1.msra.mxu0 0.0
        %318 = vmatprep.subr.mxu0 0.0
        %319 = vmatpush1.msra.mxu0 0.0
        %320 = vmatprep.subr.mxu0 0.0
        %321 = vmatpush1.msra.mxu0 0.0
        %322 = vmatprep.subr.mxu0 0.0
        %323 = vmatpush1.msra.mxu0 0.0
        %324 = vmatprep.subr.mxu0 0.0
        %325 = vmatpush1.msra.mxu0 0.0
        %326 = vmatprep.subr.mxu0 0.0
        %327 = vmatpush1.msra.mxu0 0.0
        %328 = vmatprep.subr.mxu0 0.0
        %329 = vmatpush1.msra.mxu0 0.0
        %330 = vmatprep.subr.mxu0 0.0
        %331 = vmatpush1.msra.mxu0 0.0
        %332 = vmatprep.subr.mxu0 0.0
        %333 = vmatpush1.msra.mxu0 0.0
        %334 = vmatprep.subr.mxu0 0.0
        %335 = vmatpush1.msra.mxu0 0.0
        %336 = vmatprep.subr.mxu0 0.0
        %337 = vmatpush1.msra.mxu0 0.0
        %338 = vmatprep.subr.mxu0 0.0
        %339 = vmatpush1.msra.mxu0 0.0
        %340 = vmatprep.mubr.f32.mxu0 0.0
        %341 = vmatmul.mubr.f32.gmra.mrb[0].mxu0 %v271
        %v342 = vpop.f32.mrb[0].mxu0
        %v343 = vadd.f32 %v267, %v342
        %v344 = vpop.f32.mrb[0].mxu0
        %345 = vmatprep.mubr.f32.mxu0 0.0
        %346 = vmatmul.mubr.f32.gmra.mrb[0].mxu0 %v274
        %v347 = vpop.f32.mrb[0].mxu0
        %v348 = vadd.f32 %v267, %v347
        %v349 = vpop.f32.mrb[0].mxu0
        %350 = vdwg.mxu0
        %v351 = vmax.f32 %v343, 0.0
        %v352 = vmax.f32 %v348, 0.0
        %vm353 = vcmask 523264
        %v354 = vsel %vm353, %v351, 0.0
        %v355 = vsel %vm353, %v352, 0.0
        %v356 = vadd.f32 %v354, %v355
        %v357 = vld [vmem:[#allocation2] sm:$0xff]
        %v358 = vadd.f32 %v357, %v356
        %359 = vst.msk [vmem:[#allocation2] sm:$0xff] %vm353, %v358
        // Predicated region
        $region45: #{tpu_custom_call.1} parent=39 // pred_check
          %p360 = pneg %p250
        $region46: #{tpu_custom_call.1} parent=39 // pred_check_branch
          %362 = sbr.rel (%p360) target = $region48
        $region47: #{tpu_custom_call.1} parent=39 // pred_region
          %v363 = vld [vmem:[#allocation2] sm:$0xff]
          %v364 = vsel %vm353, %v363, 0.0
          %v365 = vrot.slane %v364, 4
          %v366 = vadd.f32 %v364, %v365
          %v367 = vrot.slane %v366, 2
          %v368 = vadd.f32 %v366, %v367
          %v369 = vrot.slane %v368, 1
          %v370 = vadd.f32 %v368, %v369
          %v371 = vmul.f32 %v370, 0.0625
          %v372 = vld [vmem:[%s3] sm:$0xff]
          %v373 = vld [vmem:[%s3 + $0x8] sm:$0xff]
          %v374 = vld [vmem:[%s3 + $0x10] sm:$0xff]
          %v375 = vld [vmem:[%s3 + $0x18] sm:$0xff]
          %v376 = vld [vmem:[%s3 + $0x20] sm:$0xff]
          %v377 = vld [vmem:[%s3 + $0x28] sm:$0xff]
          %v378 = vld [vmem:[%s3 + $0x30] sm:$0xff]
          %v379 = vld [vmem:[%s3 + $0x38] sm:$0xff]
          %v380 = vld [vmem:[%s4] sm:$0x1]
          %v382 = vsel %vm353, %v371, 0
          %384 = vmatprep.subr.mxu0 0.0
          %385 = vmatpush1.msra.mxu0 %v372
          %386 = vmatprep.subr.mxu0 0.0
          %387 = vmatpush1.msra.mxu0 %v373
          %388 = vmatprep.subr.mxu0 0.0
          %389 = vmatpush1.msra.mxu0 %v374
          %390 = vmatprep.subr.mxu0 0.0
          %391 = vmatpush1.msra.mxu0 %v375
          %392 = vmatprep.subr.mxu0 0.0
          %393 = vmatpush1.msra.mxu0 %v376
          %394 = vmatprep.subr.mxu0 0.0
          %395 = vmatpush1.msra.mxu0 %v377
          %396 = vmatprep.subr.mxu0 0.0
          %397 = vmatpush1.msra.mxu0 %v378
          %398 = vmatprep.subr.mxu0 0.0
          %399 = vmatpush1.msra.mxu0 %v379
          %400 = vmatprep.subr.mxu0 0.0
          %401 = vmatpush1.msra.mxu0 0.0
          %402 = vmatprep.subr.mxu0 0.0
          %403 = vmatpush1.msra.mxu0 0.0
          %404 = vmatprep.subr.mxu0 0.0
          %405 = vmatpush1.msra.mxu0 0.0
          %406 = vmatprep.subr.mxu0 0.0
          %407 = vmatpush1.msra.mxu0 0.0
          %408 = vmatprep.subr.mxu0 0.0
          %409 = vmatpush1.msra.mxu0 0.0
          %410 = vmatprep.subr.mxu0 0.0
          %411 = vmatpush1.msra.mxu0 0.0
          %412 = vmatprep.subr.mxu0 0.0
          %413 = vmatpush1.msra.mxu0 0.0
          %414 = vmatprep.subr.mxu0 0.0
          %415 = vmatpush1.msra.mxu0 0.0
          %416 = vmatprep.subr.mxu0 0.0
          %417 = vmatpush1.msra.mxu0 0.0
          %418 = vmatprep.subr.mxu0 0.0
          %419 = vmatpush1.msra.mxu0 0.0
          %420 = vmatprep.subr.mxu0 0.0
          %421 = vmatpush1.msra.mxu0 0.0
          %422 = vmatprep.subr.mxu0 0.0
          %423 = vmatpush1.msra.mxu0 0.0
          %424 = vmatprep.subr.mxu0 0.0
          %425 = vmatpush1.msra.mxu0 0.0
          %426 = vmatprep.subr.mxu0 0.0
          %427 = vmatpush1.msra.mxu0 0.0
          %428 = vmatprep.subr.mxu0 0.0
          %429 = vmatpush1.msra.mxu0 0.0
          %430 = vmatprep.subr.mxu0 0.0
          %431 = vmatpush1.msra.mxu0 0.0
          %432 = vmatprep.subr.mxu0 0.0
          %433 = vmatpush1.msra.mxu0 0.0
          %434 = vmatprep.subr.mxu0 0.0
          %435 = vmatpush1.msra.mxu0 0.0
          %436 = vmatprep.subr.mxu0 0.0
          %437 = vmatpush1.msra.mxu0 0.0
          %438 = vmatprep.subr.mxu0 0.0
          %439 = vmatpush1.msra.mxu0 0.0
          %440 = vmatprep.subr.mxu0 0.0
          %441 = vmatpush1.msra.mxu0 0.0
          %442 = vmatprep.subr.mxu0 0.0
          %443 = vmatpush1.msra.mxu0 0.0
          %444 = vmatprep.subr.mxu0 0.0
          %445 = vmatpush1.msra.mxu0 0.0
          %446 = vmatprep.subr.mxu0 0.0
          %447 = vmatpush1.msra.mxu0 0.0
          %448 = vmatprep.mubr.f32.mxu0 0.0
          %449 = vmatmul.mubr.f32.gmra.mrb[0].mxu0 %v382
          %v450 = vpop.f32.mrb[0].mxu0
          %v451 = vadd.f32 %v380, %v450
          %v452 = vpop.f32.mrb[0].mxu0
          %453 = vdwg.mxu0
          %vm454 = vcmask 253952
          %455 = vst.msk [vmem:[%s239] sm:$0x1] %vm454, %v451
        $region48: #{tpu_custom_call.1} parent=39 // pred_fallthru
          _
        %s456 = sand.u32 %s151, 1
        %s457 = scalar_lea.sflag [#allocation4], %s456
        %s458 = sand.u32 %s151, 1
        %s459 = scalar_lea.vmem [#allocation3], %s458
        // Predicated region
        $region49: #{tpu_custom_call.1} parent=39 // pred_check
          %p460 = pneg %p161
        $region50: #{tpu_custom_call.1} parent=39 // pred_check_branch
          %462 = sbr.rel (%p460) target = $region52
        $region51: #{tpu_custom_call.1} parent=39 // pred_region
          %s464 = ssub.s32 16, 16
          %465 = vsyncadd %s457, %s464
          %s466 = smul.addr %s23, 16
          %s467 = scalar_lea.hbm %s5, %s466
          %s469 = sshll.u32 %s459, 4
          %s470 = int_to_ptr.vmem [resolvable:$true] %s469
          %472 = dma.vmem_to_hbm [thread:$0]  %s470, 16, %s467, %s457
        $region52: #{tpu_custom_call.1} parent=39 // pred_fallthru
          _
      $region40: #{tpu_custom_call.1} parent=5 // pred_fallthru
        _
      %p473 = scmp.le.s32.totalorder 2, %s14
      // Predicated region
      $region53: #{tpu_custom_call.1} parent=5 // pred_check
        %p474 = pneg %p473
      $region54: #{tpu_custom_call.1} parent=5 // pred_check_branch
        %476 = sbr.rel (%p474) target = $region56
      $region55: #{tpu_custom_call.1} parent=5 // pred_region
        %s477 = ssub.s32 %s14, 2
        // Predicated region
        $region57: #{tpu_custom_call.1} parent=55 // pred_check
          %p478 = pneg %p167
        $region58: #{tpu_custom_call.1} parent=55 // pred_check_branch
          %480 = sbr.rel (%p478) target = $region60
        $region59: #{tpu_custom_call.1} parent=55 // pred_region
          %s481 = sand.u32 %s152, 1
          %s482 = scalar_lea.sflag [#allocation4], %s481
          %s483 = sand.u32 %s152, 1
          %s484 = scalar_lea.vmem [#allocation3], %s483
          %485 = dma.done %s482, 16
        $region60: #{tpu_custom_call.1} parent=55 // pred_fallthru
          _
      $region56: #{tpu_custom_call.1} parent=5 // pred_fallthru
        _
    $region6: #{tpu_custom_call.1} parent=1 // loop_footer
      %s18 = sadd.s32 1, %s14
    $region7: #{tpu_custom_call.1} parent=1 // loop_footer_branch
      %13 = sbr.rel target = $region3
    $region8: #{tpu_custom_call.1} parent=1 // loop_exit
      _
    %486 = vsyncpa [#allocation4], 1
    %s487 = scalar_lea.sflag [#allocation4], 1
    %488 = vsyncpa %s487, 1

// kernel: tpu_custom_call.1
$region0: #{tpu_custom_call.1}
  #allocation0 [shape = 'u32[]', space=smem, size = 0x4, offset = 0x4, fixed_abs, tag = 'smem constant byte address 0x4 - core index']
  #allocation1 [shape = 'u32[144,128]{1,0:T(1,128)}', space=vmem, size = 0x12000, scoped, tag = 'internal scratch']
  #allocation2 [shape = 'f32[1,8,64]{2,1,0:T(8,128)}', space=vmem, size = 0x1000, scoped, tag = 'scratch operand']
  %s0 = inlined_call_operand.vmem [shape: f32[2,16,32], index: 0, kind: input, shape index: {}]
  %s1 = inlined_call_operand.vmem [shape: f32[32,64], index: 1, kind: input, shape index: {}]
  %s2 = inlined_call_operand.vmem [shape: f32[1,64], index: 2, kind: input, shape index: {}]
  %s3 = inlined_call_operand.vmem [shape: f32[64,32], index: 3, kind: input, shape index: {}]
  %s4 = inlined_call_operand.vmem [shape: f32[1,32], index: 4, kind: input, shape index: {}]
  %s5 = inlined_call_operand.hbm [shape: f32[2,1,32], index: 5, kind: output, shape index: {}]
  %s6 = sld [smem:[#allocation0]]
  $region61: #{tpu_custom_call.1} parent=0
    _
  %s8 = ssub.s32 1, %s6
  %s9 = scalar_select 0, %s8, %s6
  $region1: #{tpu_custom_call.1} parent=0
    #allocation3 [shape = 'u8[1024]{0}', space=vmem, size = 0x400, scoped, tag = 'output window, operand 0']
    #allocation4 [shape = 's32[2]{0}', space=sflag, size = 0x8, scoped, tag = 'scoped memory for tpu_custom_call.1']
    %10 = vsyncpa [#allocation4], 0
    %s11 = scalar_lea.sflag [#allocation4], 1
    %12 = vsyncpa %s11, 0
    loop: start=0, step=1, limit=4
    $region2: #{tpu_custom_call.1} parent=1 // loop_pre_header
      _
    $region3: #{tpu_custom_call.1} parent=1 // loop_header
      %s14 = sphi 0, %s18
      %p15 = scmp.ge.s32.totalorder %s14, 4
      %s21 = sphi 0, %s33
      %s22 = sphi 0, %s29
      %s23 = sphi 0, %s21
      %s24 = sphi 0, %s22
      %s25 = sphi 0, %s23
      %s26 = sphi 0, %s24
      %s38 = sphi 0, %s40
      %s41 = sphi 0, %s38
      %s42 = sphi 0, %s41
      %s58 = sphi 0, %s42
      %s62 = sphi 0, %s62
      %s64 = sphi 0, %s62
      %s65 = sphi 0, %s64
      %s79 = sphi 0, %s65
      %s83 = sphi 0, %s83
      %s85 = sphi 0, %s83
      %s86 = sphi 0, %s85
      %s100 = sphi 0, %s86
      %s104 = sphi 0, %s104
      %s106 = sphi 0, %s104
      %s107 = sphi 0, %s106
      %s121 = sphi 0, %s107
      %s125 = sphi 0, %s125
      %s127 = sphi 0, %s125
      %s128 = sphi 0, %s127
      %s142 = sphi 0, %s128
      %s148 = sphi 0, %s150
      %s151 = sphi 0, %s148
      %s152 = sphi 0, %s151
      %s168 = sphi 0, %s152
    $region4: #{tpu_custom_call.1} parent=1 // loop_header_branch
      %17 = sbr.rel (%p15) target = $region8
    $region5: #{tpu_custom_call.1} parent=1 // loop_body
      %s19 = ssub.s32 %s14, 1
      %s20 = ssub.s32 %s14, 2
      %s27 = sadd.s32 1, %s22
      %p28 = scmp.ge.s32.totalorder %s27, 1
      %s29 = scalar_select %p28, 0, %s27
      %s30 = sadd.s32 1, %s21
      %s31 = scalar_select %p28, %s30, %s21
      %p32 = scmp.ge.s32.totalorder %s31, 2
      %s33 = scalar_select %p32, 0, %s31
      %s34 = ssub.s32 %s21, %s33
      %s35 = ssub.s32 %s22, %s29
      %s36 = sor.u32 %s34, %s35
      %p37 = scmp.eq.s32.totalorder %s36, 0
      %s39 = sadd.s32 %s38, 1
      %s40 = scalar_select %p37, %s38, %s39
      %p43 = pneg %p37
      %p44 = scmp.eq.s32.totalorder %s14, 1
      %p45 = por %p43, %p44
      %p46 = scmp.ne.s32.totalorder %s38, %s41
      %p47 = scmp.eq.s32.totalorder %s14, 0
      %p48 = por %p46, %p47
      %p49 = scmp.ne.s32.totalorder %s38, %s41
      %p50 = scmp.eq.s32.totalorder %s19, 1
      %p51 = por %p49, %p50
      %p52 = scmp.ne.s32.totalorder %s41, %s42
      %p53 = scmp.eq.s32.totalorder %s19, 0
      %p54 = por %p52, %p53
      %p55 = scmp.ne.s32.totalorder %s41, %s42
      %p56 = scmp.eq.s32.totalorder %s20, 1
      %p57 = por %p55, %p56
      %p59 = scmp.ne.s32.totalorder %s42, %s58
      %p60 = scmp.eq.s32.totalorder %s20, 0
      %p61 = por %p59, %p60
      %s63 = sadd.s32 %s62, 1
      %p66 = scmp.eq.s32.totalorder %s14, 1
      %p67 = scmp.ne.s32.totalorder %s62, %s64
      %p68 = scmp.eq.s32.totalorder %s14, 0
      %p69 = por %p67, %p68
      %p70 = scmp.ne.s32.totalorder %s62, %s64
      %p71 = scmp.eq.s32.totalorder %s19, 1
      %p72 = por %p70, %p71
      %p73 = scmp.ne.s32.totalorder %s64, %s65
      %p74 = scmp.eq.s32.totalorder %s19, 0
      %p75 = por %p73, %p74
      %p76 = scmp.ne.s32.totalorder %s64, %s65
      %p77 = scmp.eq.s32.totalorder %s20, 1
      %p78 = por %p76, %p77
      %p80 = scmp.ne.s32.totalorder %s65, %s79
      %p81 = scmp.eq.s32.totalorder %s20, 0
      %p82 = por %p80, %p81
      %s84 = sadd.s32 %s83, 1
      %p87 = scmp.eq.s32.totalorder %s14, 1
      %p88 = scmp.ne.s32.totalorder %s83, %s85
      %p89 = scmp.eq.s32.totalorder %s14, 0
      %p90 = por %p88, %p89
      %p91 = scmp.ne.s32.totalorder %s83, %s85
      %p92 = scmp.eq.s32.totalorder %s19, 1
      %p93 = por %p91, %p92
      %p94 = scmp.ne.s32.totalorder %s85, %s86
      %p95 = scmp.eq.s32.totalorder %s19, 0
      %p96 = por %p94, %p95
      %p97 = scmp.ne.s32.totalorder %s85, %s86
      %p98 = scmp.eq.s32.totalorder %s20, 1
      %p99 = por %p97, %p98
      %p101 = scmp.ne.s32.totalorder %s86, %s100
      %p102 = scmp.eq.s32.totalorder %s20, 0
      %p103 = por %p101, %p102
      %s105 = sadd.s32 %s104, 1
      %p108 = scmp.eq.s32.totalorder %s14, 1
      %p109 = scmp.ne.s32.totalorder %s104, %s106
      %p110 = scmp.eq.s32.totalorder %s14, 0
      %p111 = por %p109, %p110
      %p112 = scmp.ne.s32.totalorder %s104, %s106
      %p113 = scmp.eq.s32.totalorder %s19, 1
      %p114 = por %p112, %p113
      %p115 = scmp.ne.s32.totalorder %s106, %s107
      %p116 = scmp.eq.s32.totalorder %s19, 0
      %p117 = por %p115, %p116
      %p118 = scmp.ne.s32.totalorder %s106, %s107
      %p119 = scmp.eq.s32.totalorder %s20, 1
      %p120 = por %p118, %p119
      %p122 = scmp.ne.s32.totalorder %s107, %s121
      %p123 = scmp.eq.s32.totalorder %s20, 0
      %p124 = por %p122, %p123
      %s126 = sadd.s32 %s125, 1
      %p129 = scmp.eq.s32.totalorder %s14, 1
      %p130 = scmp.ne.s32.totalorder %s125, %s127
      %p131 = scmp.eq.s32.totalorder %s14, 0
      %p132 = por %p130, %p131
      %p133 = scmp.ne.s32.totalorder %s125, %s127
      %p134 = scmp.eq.s32.totalorder %s19, 1
      %p135 = por %p133, %p134
      %p136 = scmp.ne.s32.totalorder %s127, %s128
      %p137 = scmp.eq.s32.totalorder %s19, 0
      %p138 = por %p136, %p137
      %p139 = scmp.ne.s32.totalorder %s127, %s128
      %p140 = scmp.eq.s32.totalorder %s20, 1
      %p141 = por %p139, %p140
      %p143 = scmp.ne.s32.totalorder %s128, %s142
      %p144 = scmp.eq.s32.totalorder %s20, 0
      %p145 = por %p143, %p144
      %s146 = ssub.s32 %s21, %s33
      %p147 = scmp.eq.s32.totalorder %s146, 0
      %s149 = sadd.s32 %s148, 1
      %s150 = scalar_select %p147, %s148, %s149
      %p153 = pneg %p147
      %p154 = scmp.eq.s32.totalorder %s14, 1
      %p155 = por %p153, %p154
      %p156 = scmp.ne.s32.totalorder %s148, %s151
      %p157 = scmp.eq.s32.totalorder %s14, 0
      %p158 = por %p156, %p157
      %p159 = scmp.ne.s32.totalorder %s148, %s151
      %p160 = scmp.eq.s32.totalorder %s19, 1
      %p161 = por %p159, %p160
      %p162 = scmp.ne.s32.totalorder %s151, %s152
      %p163 = scmp.eq.s32.totalorder %s19, 0
      %p164 = por %p162, %p163
      %p165 = scmp.ne.s32.totalorder %s151, %s152
      %p166 = scmp.eq.s32.totalorder %s20, 1
      %p167 = por %p165, %p166
      %p169 = scmp.ne.s32.totalorder %s152, %s168
      %p170 = scmp.eq.s32.totalorder %s20, 0
      %p171 = por %p169, %p170
      %p172 = scmp.le.s32.totalorder 1, %s14
      %p173 = scmp.lt.s32.totalorder %s14, 3
      %p174 = pnand %p172, %p173
      %p175 = pneg %p174
      // Predicated region
      $region9: #{tpu_custom_call.1} parent=5 // pred_check
        _
      $region10: #{tpu_custom_call.1} parent=5 // pred_check_branch
        %177 = sbr.rel (%p174) target = $region12
      $region11: #{tpu_custom_call.1} parent=5 // pred_region
        %s178 = ssub.s32 %s14, 1
        // Predicated region
        $region13: #{tpu_custom_call.1} parent=11 // pred_check
          %p179 = pneg %p75
        $region14: #{tpu_custom_call.1} parent=11 // pred_check_branch
          %181 = sbr.rel (%p179) target = $region16
        $region15: #{tpu_custom_call.1} parent=11 // pred_region
          _
        $region16: #{tpu_custom_call.1} parent=11 // pred_fallthru
          _
        // Predicated region
        $region17: #{tpu_custom_call.1} parent=11 // pred_check
          %p182 = pneg %p96
        $region18: #{tpu_custom_call.1} parent=11 // pred_check_branch
          %184 = sbr.rel (%p182) target = $region20
        $region19: #{tpu_custom_call.1} parent=11 // pred_region
          _
        $region20: #{tpu_custom_call.1} parent=11 // pred_fallthru
          _
        // Predicated region
        $region21: #{tpu_custom_call.1} parent=11 // pred_check
          %p185 = pneg %p117
        $region22: #{tpu_custom_call.1} parent=11 // pred_check_branch
          %187 = sbr.rel (%p185) target = $region24
        $region23: #{tpu_custom_call.1} parent=11 // pred_region
          _
        $region24: #{tpu_custom_call.1} parent=11 // pred_fallthru
          _
        // Predicated region
        $region25: #{tpu_custom_call.1} parent=11 // pred_check
          %p188 = pneg %p138
        $region26: #{tpu_custom_call.1} parent=11 // pred_check_branch
          %190 = sbr.rel (%p188) target = $region28
        $region27: #{tpu_custom_call.1} parent=11 // pred_region
          _
        $region28: #{tpu_custom_call.1} parent=11 // pred_fallthru
          _
      $region12: #{tpu_custom_call.1} parent=5 // pred_fallthru
        _
      %p191 = scmp.lt.s32.totalorder %s14, 2
      // Predicated region
      $region29: #{tpu_custom_call.1} parent=5 // pred_check
        %p192 = pneg %p191
      $region30: #{tpu_custom_call.1} parent=5 // pred_check_branch
        %194 = sbr.rel (%p192) target = $region32
      $region31: #{tpu_custom_call.1} parent=5 // pred_region
        // Predicated region
        $region33: #{tpu_custom_call.1} parent=31 // pred_check
          %p195 = pneg %p48
        $region34: #{tpu_custom_call.1} parent=31 // pred_check_branch
          %197 = sbr.rel (%p195) target = $region36
        $region35: #{tpu_custom_call.1} parent=31 // pred_region
          %s198 = smul.u32 2, %s22
          %p199 = scmp.lt.s32.totalorder %s21, 1
          %s200 = scalar_select %p199, %s21, 1
          %p201 = scmp.lt.s32.totalorder %s198, 1
          %s202 = scalar_select %p201, %s198, 1
          %s203 = smul.addr %s200, 2
          %s204 = sadd.s32 %s202, %s203
          %s205 = smul.addr %s204, 8
          %s206 = scalar_lea.vmem %s0, %s205
          %s207 = smul.u32 2, %s22
        $region36: #{tpu_custom_call.1} parent=31 // pred_fallthru
          _
      $region32: #{tpu_custom_call.1} parent=5 // pred_fallthru
        _
      %p208 = scmp.le.s32.totalorder 1, %s14
      %p209 = scmp.lt.s32.totalorder %s14, 3
      %p210 = pnand %p208, %p209
      %p211 = pneg %p210
      // Predicated region
      $region37: #{tpu_custom_call.1} parent=5 // pred_check
        _
      $region38: #{tpu_custom_call.1} parent=5 // pred_check_branch
        %213 = sbr.rel (%p210) target = $region40
      $region39: #{tpu_custom_call.1} parent=5 // pred_region
        %s214 = ssub.s32 %s14, 1
        %s215 = smul.u32 2, %s24
        %p216 = scmp.lt.s32.totalorder %s23, 1
        %s217 = scalar_select %p216, %s23, 1
        %p218 = scmp.lt.s32.totalorder %s215, 1
        %s219 = scalar_select %p218, %s215, 1
        %s220 = smul.addr %s217, 2
        %s221 = sadd.s32 %s219, %s220
        %s222 = smul.addr %s221, 8
        %s223 = scalar_lea.vmem %s0, %s222
        %p224 = pneg %p54
        %p225 = pneg %p51
        %p226 = pneg %p75
        %p227 = pneg %p72
        %p228 = pneg %p96
        %p229 = pneg %p93
        %p230 = pneg %p117
        %p231 = pneg %p114
        %p232 = pneg %p138
        %p233 = pneg %p135
        %p234 = pneg %p164
        %p235 = pneg %p161
        %s236 = sand.u32 %s151, 1
        %s237 = scalar_lea.sflag [#allocation4], %s236
        %s238 = sand.u32 %s151, 1
        %s239 = scalar_lea.vmem [#allocation3], %s238
        %s240 = smul.u32 2, %s24
        %p241 = scmp.lt.s32.totalorder %s23, 1
        %s242 = scalar_select %p241, %s23, 1
        %p243 = scmp.lt.s32.totalorder %s240, 1
        %s244 = scalar_select %p243, %s240, 1
        %s245 = smul.addr %s242, 2
        %s246 = sadd.s32 %s244, %s245
        %s247 = smul.addr %s246, 8
        %s248 = scalar_lea.vmem %s0, %s247
        %s249 = smul.u32 2, %s24
        %p250 = scmp.eq.s32.totalorder %s24, 0
        // Predicated region
        $region41: #{tpu_custom_call.1} parent=39 // pred_check
          %p251 = pneg %p250
        $region42: #{tpu_custom_call.1} parent=39 // pred_check_branch
          %253 = sbr.rel (%p251) target = $region44
        $region43: #{tpu_custom_call.1} parent=39 // pred_region
          %vm254 = vcmask 523264
          %255 = vst.msk [vmem:[#allocation2] sm:$0xff] %vm254, 0.0
        $region44: #{tpu_custom_call.1} parent=39 // pred_fallthru
          _
        %v256 = vld [vmem:[%s248] sm:$0xff]
        %v257 = vld [vmem:[%s248 + $0x8] sm:$0xff]
        %v258 = vld [vmem:[%s1] sm:$0xff]
        %v259 = vld [vmem:[%s1 + $0x8] sm:$0xff]
        %v260 = vld [vmem:[%s1 + $0x10] sm:$0xff]
        %v261 = vld [vmem:[%s1 + $0x18] sm:$0xff]
        %v262 = vld [vmem:[%s2] sm:$0x1]
        %v264 = vlaneseq
        %v265 = vshrl.u32 %v264, 7
        %v266 = vsub.s32 0, %v265
        %v267 = vrot.slane %v262, %v266
        %vm269 = vcmask 261120
        %v271 = vsel %vm269, %v256, 0
        %v274 = vsel %vm269, %v257, 0
        %276 = vmatprep.subr.mxu0 0.0
        %277 = vmatpush1.msra.mxu0 %v258
        %278 = vmatprep.subr.mxu0 0.0
        %279 = vmatpush1.msra.mxu0 %v259
        %280 = vmatprep.subr.mxu0 0.0
        %281 = vmatpush1.msra.mxu0 %v260
        %282 = vmatprep.subr.mxu0 0.0
        %283 = vmatpush1.msra.mxu0 %v261
        %284 = vmatprep.subr.mxu0 0.0
        %285 = vmatpush1.msra.mxu0 0.0
        %286 = vmatprep.subr.mxu0 0.0
        %287 = vmatpush1.msra.mxu0 0.0
        %288 = vmatprep.subr.mxu0 0.0
        %289 = vmatpush1.msra.mxu0 0.0
        %290 = vmatprep.subr.mxu0 0.0
        %291 = vmatpush1.msra.mxu0 0.0
        %292 = vmatprep.subr.mxu0 0.0
        %293 = vmatpush1.msra.mxu0 0.0
        %294 = vmatprep.subr.mxu0 0.0
        %295 = vmatpush1.msra.mxu0 0.0
        %296 = vmatprep.subr.mxu0 0.0
        %297 = vmatpush1.msra.mxu0 0.0
        %298 = vmatprep.subr.mxu0 0.0
        %299 = vmatpush1.msra.mxu0 0.0
        %300 = vmatprep.subr.mxu0 0.0
        %301 = vmatpush1.msra.mxu0 0.0
        %302 = vmatprep.subr.mxu0 0.0
        %303 = vmatpush1.msra.mxu0 0.0
        %304 = vmatprep.subr.mxu0 0.0
        %305 = vmatpush1.msra.mxu0 0.0
        %306 = vmatprep.subr.mxu0 0.0
        %307 = vmatpush1.msra.mxu0 0.0
        %308 = vmatprep.subr.mxu0 0.0
        %309 = vmatpush1.msra.mxu0 0.0
        %310 = vmatprep.subr.mxu0 0.0
        %311 = vmatpush1.msra.mxu0 0.0
        %312 = vmatprep.subr.mxu0 0.0
        %313 = vmatpush1.msra.mxu0 0.0
        %314 = vmatprep.subr.mxu0 0.0
        %315 = vmatpush1.msra.mxu0 0.0
        %316 = vmatprep.subr.mxu0 0.0
        %317 = vmatpush1.msra.mxu0 0.0
        %318 = vmatprep.subr.mxu0 0.0
        %319 = vmatpush1.msra.mxu0 0.0
        %320 = vmatprep.subr.mxu0 0.0
        %321 = vmatpush1.msra.mxu0 0.0
        %322 = vmatprep.subr.mxu0 0.0
        %323 = vmatpush1.msra.mxu0 0.0
        %324 = vmatprep.subr.mxu0 0.0
        %325 = vmatpush1.msra.mxu0 0.0
        %326 = vmatprep.subr.mxu0 0.0
        %327 = vmatpush1.msra.mxu0 0.0
        %328 = vmatprep.subr.mxu0 0.0
        %329 = vmatpush1.msra.mxu0 0.0
        %330 = vmatprep.subr.mxu0 0.0
        %331 = vmatpush1.msra.mxu0 0.0
        %332 = vmatprep.subr.mxu0 0.0
        %333 = vmatpush1.msra.mxu0 0.0
        %334 = vmatprep.subr.mxu0 0.0
        %335 = vmatpush1.msra.mxu0 0.0
        %336 = vmatprep.subr.mxu0 0.0
        %337 = vmatpush1.msra.mxu0 0.0
        %338 = vmatprep.subr.mxu0 0.0
        %339 = vmatpush1.msra.mxu0 0.0
        %340 = vmatprep.mubr.f32.mxu0 0.0
        %341 = vmatmul.mubr.f32.gmra.mrb[0].mxu0 %v271
        %v342 = vpop.f32.mrb[0].mxu0
        %v343 = vadd.f32 %v267, %v342
        %v344 = vpop.f32.mrb[0].mxu0
        %345 = vmatprep.mubr.f32.mxu0 0.0
        %346 = vmatmul.mubr.f32.gmra.mrb[0].mxu0 %v274
        %v347 = vpop.f32.mrb[0].mxu0
        %v348 = vadd.f32 %v267, %v347
        %v349 = vpop.f32.mrb[0].mxu0
        %350 = vdwg.mxu0
        %v351 = vmax.f32 %v343, 0.0
        %v352 = vmax.f32 %v348, 0.0
        %vm353 = vcmask 523264
        %v354 = vsel %vm353, %v351, 0.0
        %v355 = vsel %vm353, %v352, 0.0
        %v356 = vadd.f32 %v354, %v355
        %v357 = vld [vmem:[#allocation2] sm:$0xff]
        %v358 = vadd.f32 %v357, %v356
        %359 = vst.msk [vmem:[#allocation2] sm:$0xff] %vm353, %v358
        // Predicated region
        $region45: #{tpu_custom_call.1} parent=39 // pred_check
          %p360 = pneg %p250
        $region46: #{tpu_custom_call.1} parent=39 // pred_check_branch
          %362 = sbr.rel (%p360) target = $region48
        $region47: #{tpu_custom_call.1} parent=39 // pred_region
          %v363 = vld [vmem:[#allocation2] sm:$0xff]
          %v364 = vsel %vm353, %v363, 0.0
          %v365 = vrot.slane %v364, 4
          %v366 = vadd.f32 %v364, %v365
          %v367 = vrot.slane %v366, 2
          %v368 = vadd.f32 %v366, %v367
          %v369 = vrot.slane %v368, 1
          %v370 = vadd.f32 %v368, %v369
          %v371 = vmul.f32 %v370, 0.0625
          %v372 = vld [vmem:[%s3] sm:$0xff]
          %v373 = vld [vmem:[%s3 + $0x8] sm:$0xff]
          %v374 = vld [vmem:[%s3 + $0x10] sm:$0xff]
          %v375 = vld [vmem:[%s3 + $0x18] sm:$0xff]
          %v376 = vld [vmem:[%s3 + $0x20] sm:$0xff]
          %v377 = vld [vmem:[%s3 + $0x28] sm:$0xff]
          %v378 = vld [vmem:[%s3 + $0x30] sm:$0xff]
          %v379 = vld [vmem:[%s3 + $0x38] sm:$0xff]
          %v380 = vld [vmem:[%s4] sm:$0x1]
          %v382 = vsel %vm353, %v371, 0
          %384 = vmatprep.subr.mxu0 0.0
          %385 = vmatpush1.msra.mxu0 %v372
          %386 = vmatprep.subr.mxu0 0.0
          %387 = vmatpush1.msra.mxu0 %v373
          %388 = vmatprep.subr.mxu0 0.0
          %389 = vmatpush1.msra.mxu0 %v374
          %390 = vmatprep.subr.mxu0 0.0
          %391 = vmatpush1.msra.mxu0 %v375
          %392 = vmatprep.subr.mxu0 0.0
          %393 = vmatpush1.msra.mxu0 %v376
          %394 = vmatprep.subr.mxu0 0.0
          %395 = vmatpush1.msra.mxu0 %v377
          %396 = vmatprep.subr.mxu0 0.0
          %397 = vmatpush1.msra.mxu0 %v378
          %398 = vmatprep.subr.mxu0 0.0
          %399 = vmatpush1.msra.mxu0 %v379
          %400 = vmatprep.subr.mxu0 0.0
          %401 = vmatpush1.msra.mxu0 0.0
          %402 = vmatprep.subr.mxu0 0.0
          %403 = vmatpush1.msra.mxu0 0.0
          %404 = vmatprep.subr.mxu0 0.0
          %405 = vmatpush1.msra.mxu0 0.0
          %406 = vmatprep.subr.mxu0 0.0
          %407 = vmatpush1.msra.mxu0 0.0
          %408 = vmatprep.subr.mxu0 0.0
          %409 = vmatpush1.msra.mxu0 0.0
          %410 = vmatprep.subr.mxu0 0.0
          %411 = vmatpush1.msra.mxu0 0.0
          %412 = vmatprep.subr.mxu0 0.0
          %413 = vmatpush1.msra.mxu0 0.0
          %414 = vmatprep.subr.mxu0 0.0
          %415 = vmatpush1.msra.mxu0 0.0
          %416 = vmatprep.subr.mxu0 0.0
          %417 = vmatpush1.msra.mxu0 0.0
          %418 = vmatprep.subr.mxu0 0.0
          %419 = vmatpush1.msra.mxu0 0.0
          %420 = vmatprep.subr.mxu0 0.0
          %421 = vmatpush1.msra.mxu0 0.0
          %422 = vmatprep.subr.mxu0 0.0
          %423 = vmatpush1.msra.mxu0 0.0
          %424 = vmatprep.subr.mxu0 0.0
          %425 = vmatpush1.msra.mxu0 0.0
          %426 = vmatprep.subr.mxu0 0.0
          %427 = vmatpush1.msra.mxu0 0.0
          %428 = vmatprep.subr.mxu0 0.0
          %429 = vmatpush1.msra.mxu0 0.0
          %430 = vmatprep.subr.mxu0 0.0
          %431 = vmatpush1.msra.mxu0 0.0
          %432 = vmatprep.subr.mxu0 0.0
          %433 = vmatpush1.msra.mxu0 0.0
          %434 = vmatprep.subr.mxu0 0.0
          %435 = vmatpush1.msra.mxu0 0.0
          %436 = vmatprep.subr.mxu0 0.0
          %437 = vmatpush1.msra.mxu0 0.0
          %438 = vmatprep.subr.mxu0 0.0
          %439 = vmatpush1.msra.mxu0 0.0
          %440 = vmatprep.subr.mxu0 0.0
          %441 = vmatpush1.msra.mxu0 0.0
          %442 = vmatprep.subr.mxu0 0.0
          %443 = vmatpush1.msra.mxu0 0.0
          %444 = vmatprep.subr.mxu0 0.0
          %445 = vmatpush1.msra.mxu0 0.0
          %446 = vmatprep.subr.mxu0 0.0
          %447 = vmatpush1.msra.mxu0 0.0
          %448 = vmatprep.mubr.f32.mxu0 0.0
          %449 = vmatmul.mubr.f32.gmra.mrb[0].mxu0 %v382
          %v450 = vpop.f32.mrb[0].mxu0
          %v451 = vadd.f32 %v380, %v450
          %v452 = vpop.f32.mrb[0].mxu0
          %453 = vdwg.mxu0
          %vm454 = vcmask 253952
          %455 = vst.msk [vmem:[%s239] sm:$0x1] %vm454, %v451
        $region48: #{tpu_custom_call.1} parent=39 // pred_fallthru
          _
        %s456 = sand.u32 %s151, 1
        %s457 = scalar_lea.sflag [#allocation4], %s456
        %s458 = sand.u32 %s151, 1
        %s459 = scalar_lea.vmem [#allocation3], %s458
        // Predicated region
        $region49: #{tpu_custom_call.1} parent=39 // pred_check
          %p460 = pneg %p161
        $region50: #{tpu_custom_call.1} parent=39 // pred_check_branch
          %462 = sbr.rel (%p460) target = $region52
        $region51: #{tpu_custom_call.1} parent=39 // pred_region
          %s464 = ssub.s32 16, 16
          %465 = vsyncadd %s457, %s464
          %s466 = smul.addr %s23, 16
          %s467 = scalar_lea.hbm %s5, %s466
          %s469 = sshll.u32 %s459, 4
          %s470 = int_to_ptr.vmem [resolvable:$true] %s469
          %472 = dma.vmem_to_hbm [thread:$0]  %s470, 16, %s467, %s457
        $region52: #{tpu_custom_call.1} parent=39 // pred_fallthru
          _
      $region40: #{tpu_custom_call.1} parent=5 // pred_fallthru
        _
      %p473 = scmp.le.s32.totalorder 2, %s14
      // Predicated region
      $region53: #{tpu_custom_call.1} parent=5 // pred_check
        %p474 = pneg %p473
      $region54: #{tpu_custom_call.1} parent=5 // pred_check_branch
        %476 = sbr.rel (%p474) target = $region56
      $region55: #{tpu_custom_call.1} parent=5 // pred_region
        %s477 = ssub.s32 %s14, 2
        // Predicated region
        $region57: #{tpu_custom_call.1} parent=55 // pred_check
          %p478 = pneg %p167
        $region58: #{tpu_custom_call.1} parent=55 // pred_check_branch
          %480 = sbr.rel (%p478) target = $region60
        $region59: #{tpu_custom_call.1} parent=55 // pred_region
          %s481 = sand.u32 %s152, 1
          %s482 = scalar_lea.sflag [#allocation4], %s481
          %s483 = sand.u32 %s152, 1
          %s484 = scalar_lea.vmem [#allocation3], %s483
          %485 = dma.done %s482, 16
        $region60: #{tpu_custom_call.1} parent=55 // pred_fallthru
          _
      $region56: #{tpu_custom_call.1} parent=5 // pred_fallthru
        _
    $region6: #{tpu_custom_call.1} parent=1 // loop_footer
      %s18 = sadd.s32 1, %s14
    $region7: #{tpu_custom_call.1} parent=1 // loop_footer_branch
      %13 = sbr.rel target = $region3
    $region8: #{tpu_custom_call.1} parent=1 // loop_exit
      _
    %486 = vsyncpa [#allocation4], 1
    %s487 = scalar_lea.sflag [#allocation4], 1
    %488 = vsyncpa %s487, 1

</llo_original>
